<compile_context>
chip_gen: v6e
topology: v6e:2x2x1
jax: 0.10.0
libtpu: 0.0.40
codegen_flags: <defaults>
</compile_context>

<pallas_src>
import jax
import jax.numpy as jnp
from jax.experimental import pallas as pl
from jax.experimental.pallas import tpu as pltpu

BN_EPS = 1e-5


def _projection_head_kernel(x_ref, w1_ref, gb_ref, w2_ref, b2_ref, o_ref, acc_ref):
    h_idx = pl.program_id(0)

    # Fold the Linear2 bias into accumulator initialization (first H-tile only).
    @pl.when(h_idx == 0)
    def _():
        acc_ref[...] = jnp.broadcast_to(b2_ref[...], acc_ref.shape)

    # ---- Linear 1 (this H-tile): bf16 operands, f32 accumulate on the MXU ----
    # b1 is intentionally omitted: train-mode BN cancels a per-feature bias.
    h = jnp.dot(x_ref[...], w1_ref[...], preferred_element_type=jnp.float32)

    # ---- BatchNorm1d, training mode (biased full-batch stats, per feature) ----
    # One-pass stats: E[h] and E[h^2] in a single sweep over the (B, tile_h) tile.
    mean = jnp.mean(h, axis=0, keepdims=True)                 # (1, tile_h)
    mean_sq = jnp.mean(h * h, axis=0, keepdims=True)          # (1, tile_h)
    var = jnp.maximum(mean_sq - mean * mean, 0.0)             # guard tiny negatives
    gamma = gb_ref[0:1, :]
    beta = gb_ref[1:2, :]
    scale = jax.lax.rsqrt(var + BN_EPS) * gamma               # fold inv_std * gamma
    shift = beta - mean * scale                               # fold beta - mean*scale

    # ---- ReLU (fused with the affine) ----
    h = jnp.maximum(h * scale + shift, 0.0)

    # ---- Linear 2 partial product: accumulate over H-tiles ----
    acc_ref[...] += jnp.dot(h.astype(jnp.bfloat16), w2_ref[...],
                            preferred_element_type=jnp.float32)

    @pl.when(h_idx == pl.num_programs(0) - 1)
    def _():
        o_ref[...] = acc_ref[...].astype(o_ref.dtype)


def _physical_vmem_bytes():
    """Device VMEM capacity (falls back to the v7x floor if the query fails)."""
    try:
        return int(pltpu.get_tpu_info().vmem_capacity_bytes)
    except Exception:
        return 64 << 20


def _vmem_limit_bytes(B, D_in, tile_h, D_out):
    """Per-step footprint incl. double-buffered tiles and BN intermediates."""
    bf16, f32 = 2, 4
    pipelined = (D_in * tile_h * bf16        # w1 tile
                 + 2 * tile_h * f32          # gamma/beta tile
                 + tile_h * D_out * bf16     # w2 tile
                 + D_out * f32               # b2
                 + B * D_out * f32)          # output block
    resident = (B * D_in * bf16              # x (constant index -> single DMA)
                + B * D_out * f32            # f32 accumulator scratch
                + 3 * B * tile_h * f32)      # compiler-managed BN/matmul temporaries
    total = 2 * pipelined + resident + (4 << 20)     # 2x for pipelining + headroom
    cap = _physical_vmem_bytes() - (8 << 20)         # leave room for Mosaic internals
    return int(min(max(total, 16 << 20), cap))


def projection_head_forward(x, params, *, tile_h=128):
    """x: (B, D_in). params: dict of w1, b1, gamma, beta, w2, b2.

    Grid is a pure hidden-dim reduction; the batch and D_out are single blocks
    (BN needs full-batch stats; typical SSL heads have D_out <= 512).
    tile_h: 512-1024 on v6e/v5e (128 MiB VMEM), 128-256 on v7x (64 MiB VMEM).
    """
    B, D_in = x.shape
    H = params["w1"].shape[1]
    D_out = params["w2"].shape[1]

    tile_h = min(tile_h, H)
    assert H % tile_h == 0, "hidden_dim must be divisible by tile_h"

    # bf16 matmul operands (halves weight DMA bytes, full MXU rate); f32 vectors.
    x_bf16 = x.astype(jnp.bfloat16)
    w1 = params["w1"].astype(jnp.bfloat16)
    w2 = params["w2"].astype(jnp.bfloat16)
    # b1 is mathematically cancelled by train-mode BN -> not passed to the kernel.
    gb = jnp.concatenate([params["gamma"].astype(jnp.float32),
                          params["beta"].astype(jnp.float32)], axis=0)   # (2, H)
    b2 = params["b2"].astype(jnp.float32)

    n_h = H // tile_h   # reduction axis (hidden tiles)

    cost = pl.CostEstimate(
        flops=2 * B * D_in * H + 2 * B * H * D_out,
        transcendentals=H,  # one rsqrt per hidden feature
        bytes_accessed=(B * D_in * 2 + D_in * H * 2 + H * D_out * 2
                        + (2 * H + D_out) * 4 + B * D_out * 4),
    )

    return pl.pallas_call(
        _projection_head_kernel,
        out_shape=jax.ShapeDtypeStruct((B, D_out), jnp.float32),
        grid_spec=pltpu.PrefetchScalarGridSpec(
            num_scalar_prefetch=0,
            grid=(n_h,),
            in_specs=[
                # x: full batch resident (BN needs full-batch stats); constant
                # block index -> DMA'd once, not per grid step.
                pl.BlockSpec((B, D_in), lambda h: (0, 0)),
                pl.BlockSpec((D_in, tile_h), lambda h: (0, h)),   # w1 tile
                pl.BlockSpec((2, tile_h), lambda h: (0, h)),      # [gamma; beta]
                pl.BlockSpec((tile_h, D_out), lambda h: (h, 0)),  # w2 tile
                pl.BlockSpec((1, D_out), lambda h: (0, 0)),       # b2 (resident)
            ],
            out_specs=pl.BlockSpec((B, D_out), lambda h: (0, 0)),
            scratch_shapes=[pltpu.VMEM((B, D_out), jnp.float32)],  # Linear2 accumulator
        ),
        compiler_params=pltpu.CompilerParams(
            dimension_semantics=("arbitrary",),
            vmem_limit_bytes=_vmem_limit_bytes(B, D_in, tile_h, D_out),
        ),
        cost_estimate=cost,
    )(x_bf16, w1, gb, w2, b2)


def init_params(key, input_dim, hidden_dim, output_dim, dtype=jnp.float32):
    """nn.Linear default init (uniform +-1/sqrt(fan_in)); BN gamma=1, beta=0."""
    k1, k2, k3, k4 = jax.random.split(key, 4)
    bound1 = 1.0 / (input_dim ** 0.5)
    bound2 = 1.0 / (hidden_dim ** 0.5)
    return {
        "w1": jax.random.uniform(k1, (input_dim, hidden_dim), dtype,
                                 minval=-bound1, maxval=bound1),
        "b1": jax.random.uniform(k2, (1, hidden_dim), dtype,
                                 minval=-bound1, maxval=bound1),
        "gamma": jnp.ones((1, hidden_dim), dtype),
        "beta": jnp.zeros((1, hidden_dim), dtype),
        "w2": jax.random.uniform(k3, (hidden_dim, output_dim), dtype,
                                 minval=-bound2, maxval=bound2),
        "b2": jax.random.uniform(k4, (1, output_dim), dtype,
                                 minval=-bound2, maxval=bound2),
    }


def _reference_forward_f32(x, p):
    """Pure f32 reference matching the PyTorch module's math (incl. b1)."""
    h = x @ p["w1"] + p["b1"]
    mean = h.mean(axis=0, keepdims=True)
    var = ((h - mean) ** 2).mean(axis=0, keepdims=True)
    h = (h - mean) / jnp.sqrt(var + BN_EPS) * p["gamma"] + p["beta"]
    h = jnp.maximum(h, 0.0)
    return h @ p["w2"] + p["b2"]


def _reference_forward_bf16_policy(x, p):
    """Reference with the kernel's precision policy (bf16 matmuls, f32 stats,
    b1 dropped, one-pass variance)."""
    xb = x.astype(jnp.bfloat16)
    w1b = p["w1"].astype(jnp.bfloat16)
    w2b = p["w2"].astype(jnp.bfloat16)
    h = jnp.dot(xb, w1b, preferred_element_type=jnp.float32)
    mean = h.mean(axis=0, keepdims=True)
    mean_sq = (h * h).mean(axis=0, keepdims=True)
    var = jnp.maximum(mean_sq - mean * mean, 0.0)
    scale = jax.lax.rsqrt(var + BN_EPS) * p["gamma"]
    shift = p["beta"] - mean * scale
    h = jnp.maximum(h * scale + shift, 0.0)
    return jnp.dot(h.astype(jnp.bfloat16), w2b,
                   preferred_element_type=jnp.float32) + p["b2"]


if __name__ == "__main__":
    key = jax.random.PRNGKey(0)
    kx, kp = jax.random.split(key)

    # Small but lane-dense shapes (multiples of 128 on feature dims).
    B, INPUT_DIM, HIDDEN_DIM, OUTPUT_DIM = 8, 128, 256, 128

    x = jax.random.normal(kx, (B, INPUT_DIM), jnp.float32)
    params = init_params(kp, INPUT_DIM, HIDDEN_DIM, OUTPUT_DIM)

    # tile_h=128 -> 2-step pure H-reduction grid.
    out = projection_head_forward(x, params, tile_h=128)
    out = jax.block_until_ready(out)
    assert out.shape == (B, OUTPUT_DIM)

    # Tight check vs a reference using the kernel's exact precision policy.
    ref_bf16 = _reference_forward_bf16_policy(x, params)
    assert jnp.allclose(out, ref_bf16, atol=1e-3, rtol=1e-3), \
        "mismatch vs bf16-policy reference"

    # Looser check vs the pure-f32 module semantics (validates that dropping b1
    # and the one-pass variance match the PyTorch math up to bf16 rounding).
    ref_f32 = _reference_forward_f32(x, params)
    assert jnp.allclose(out, ref_f32, atol=5e-2, rtol=5e-2), \
        "mismatch vs f32 reference"

    print("KERNEL_OK")
</pallas_src>

<mosaic_0001>
module attributes {stable_mosaic.version = 11 : i64} {
  func.func @_projection_head_kernel(%arg0: i32, %arg1: memref<8x128xbf16, #tpu.memory_space<vmem>>, %arg2: memref<128x128xbf16, #tpu.memory_space<vmem>>, %arg3: memref<2x128xf32, #tpu.memory_space<vmem>>, %arg4: memref<128x128xbf16, #tpu.memory_space<vmem>>, %arg5: memref<1x128xf32, #tpu.memory_space<vmem>>, %arg6: memref<8x128xf32, #tpu.memory_space<vmem>>, %arg7: memref<8x128xf32, #tpu.memory_space<vmem>>) attributes {dimension_semantics = [#tpu.dimension_semantics<arbitrary>], iteration_bounds = array<i64: 2>, scalar_prefetch = 0 : i64, scratch_operands = 1 : i64, tpu.core_type = #tpu.core_type<tc>, window_params = [{pipeline_mode = #tpu.pipeline_mode<synchronous>, transform_indices = @transform_0, window_bounds = array<i64: 8, 128>}, {transform_indices = @transform_1, window_bounds = array<i64: 128, 128>}, {transform_indices = @transform_2, window_bounds = array<i64: 2, 128>}, {transform_indices = @transform_3, window_bounds = array<i64: 128, 128>}, {pipeline_mode = #tpu.pipeline_mode<synchronous>, transform_indices = @transform_4, window_bounds = array<i64: 1, 128>}, {pipeline_mode = #tpu.pipeline_mode<synchronous>, transform_indices = @transform_5, window_bounds = array<i64: 8, 128>}]} {
    %c0_i32 = arith.constant 0 : i32
    %0 = arith.cmpi eq, %arg0, %c0_i32 : i32
    %1 = arith.extui %0 : i1 to i32
    %c0_i32_0 = arith.constant 0 : i32
    %2 = arith.cmpi ne, %1, %c0_i32_0 : i32
    scf.if %2 {
      %c0_22 = arith.constant 0 : index
      %c0_23 = arith.constant 0 : index
      %42 = vector.load %arg5[%c0_22, %c0_23] : memref<1x128xf32, #tpu.memory_space<vmem>>, vector<1x128xf32>
      %43 = vector.shape_cast %42 : vector<1x128xf32> to vector<1x128xf32>
      %44 = vector.broadcast %43 : vector<1x128xf32> to vector<8x128xf32>
      %c0_24 = arith.constant 0 : index
      %c0_25 = arith.constant 0 : index
      %45 = vector.load %arg7[%c0_24, %c0_25] : memref<8x128xf32, #tpu.memory_space<vmem>>, vector<8x128xf32>
      tpu.vector_store %arg7[%c0_24, %c0_25], %44 {strides = array<i32>} : memref<8x128xf32, #tpu.memory_space<vmem>>, vector<8x128xf32>,
    } else {
    }
    %c0 = arith.constant 0 : index
    %c0_1 = arith.constant 0 : index
    %3 = vector.load %arg1[%c0, %c0_1] : memref<8x128xbf16, #tpu.memory_space<vmem>>, vector<8x128xbf16>
    %c0_2 = arith.constant 0 : index
    %c0_3 = arith.constant 0 : index
    %4 = vector.load %arg2[%c0_2, %c0_3] : memref<128x128xbf16, #tpu.memory_space<vmem>>, vector<128x128xbf16>
    %cst = arith.constant dense<0.000000e+00> : vector<8x128xf32>
    %5 = tpu.matmul %3, %4, %cst {dimension_numbers = #tpu.dot_dimension_numbers<[1], [0], [0], [1], [0, 0, 1, 1], [], []>} : vector<8x128xbf16>, vector<128x128xbf16>, vector<8x128xf32> -> vector<8x128xf32>
    %cst_4 = arith.constant dense<0.000000e+00> : vector<128xf32>
    %6 = vector.multi_reduction <add>, %5, %cst_4 [0] : vector<8x128xf32> to vector<128xf32>
    %7 = vector.shape_cast %6 : vector<128xf32> to vector<1x128xf32>
    %cst_5 = arith.constant 8.000000e+00 : f32
    %8 = vector.broadcast %cst_5 : f32 to vector<1x128xf32>
    %9 = arith.divf %7, %8 : vector<1x128xf32>
    %10 = arith.mulf %5, %5 : vector<8x128xf32>
    %cst_6 = arith.constant dense<0.000000e+00> : vector<128xf32>
    %11 = vector.multi_reduction <add>, %10, %cst_6 [0] : vector<8x128xf32> to vector<128xf32>
    %12 = vector.shape_cast %11 : vector<128xf32> to vector<1x128xf32>
    %cst_7 = arith.constant 8.000000e+00 : f32
    %13 = vector.broadcast %cst_7 : f32 to vector<1x128xf32>
    %14 = arith.divf %12, %13 : vector<1x128xf32>
    %15 = arith.mulf %9, %9 : vector<1x128xf32>
    %16 = arith.subf %14, %15 : vector<1x128xf32>
    %cst_8 = arith.constant 0.000000e+00 : f32
    %17 = vector.broadcast %cst_8 : f32 to vector<1x128xf32>
    %18 = arith.maximumf %16, %17 : vector<1x128xf32>
    %c0_9 = arith.constant 0 : index
    %c0_10 = arith.constant 0 : index
    %19 = vector.load %arg3[%c0_9, %c0_10] : memref<2x128xf32, #tpu.memory_space<vmem>>, vector<1x128xf32>
    %c1 = arith.constant 1 : index
    %c0_11 = arith.constant 0 : index
    %20 = vector.load %arg3[%c1, %c0_11] : memref<2x128xf32, #tpu.memory_space<vmem>>, vector<1x128xf32>
    %cst_12 = arith.constant 9.99999974E-6 : f32
    %21 = vector.broadcast %cst_12 : f32 to vector<1x128xf32>
    %22 = arith.addf %18, %21 : vector<1x128xf32>
    %23 = math.rsqrt %22 : vector<1x128xf32>
    %24 = arith.mulf %23, %19 : vector<1x128xf32>
    %25 = arith.mulf %9, %24 : vector<1x128xf32>
    %26 = arith.subf %20, %25 : vector<1x128xf32>
    %27 = vector.broadcast %24 : vector<1x128xf32> to vector<8x128xf32>
    %28 = arith.mulf %5, %27 : vector<8x128xf32>
    %29 = vector.broadcast %26 : vector<1x128xf32> to vector<8x128xf32>
    %30 = arith.addf %28, %29 : vector<8x128xf32>
    %cst_13 = arith.constant 0.000000e+00 : f32
    %31 = vector.broadcast %cst_13 : f32 to vector<8x128xf32>
    %32 = arith.maximumf %30, %31 : vector<8x128xf32>
    %c0_14 = arith.constant 0 : index
    %c0_15 = arith.constant 0 : index
    %33 = vector.load %arg7[%c0_14, %c0_15] : memref<8x128xf32, #tpu.memory_space<vmem>>, vector<8x128xf32>
    %34 = arith.truncf %32 : vector<8x128xf32> to vector<8x128xbf16>
    %c0_16 = arith.constant 0 : index
    %c0_17 = arith.constant 0 : index
    %35 = vector.load %arg4[%c0_16, %c0_17] : memref<128x128xbf16, #tpu.memory_space<vmem>>, vector<128x128xbf16>
    %cst_18 = arith.constant dense<0.000000e+00> : vector<8x128xf32>
    %36 = tpu.matmul %34, %35, %cst_18 {dimension_numbers = #tpu.dot_dimension_numbers<[1], [0], [0], [1], [0, 0, 1, 1], [], []>} : vector<8x128xbf16>, vector<128x128xbf16>, vector<8x128xf32> -> vector<8x128xf32>
    %37 = arith.addf %33, %36 : vector<8x128xf32>
    %c0_19 = arith.constant 0 : index
    %c0_20 = arith.constant 0 : index
    %38 = vector.load %arg7[%c0_19, %c0_20] : memref<8x128xf32, #tpu.memory_space<vmem>>, vector<8x128xf32>
    tpu.vector_store %arg7[%c0_19, %c0_20], %37 {strides = array<i32>} : memref<8x128xf32, #tpu.memory_space<vmem>>, vector<8x128xf32>,
    %c1_i32 = arith.constant 1 : i32
    %39 = arith.cmpi eq, %arg0, %c1_i32 : i32
    %40 = arith.extui %39 : i1 to i32
    %c0_i32_21 = arith.constant 0 : i32
    %41 = arith.cmpi ne, %40, %c0_i32_21 : i32
    scf.if %41 {
      %c0_22 = arith.constant 0 : index
      %c0_23 = arith.constant 0 : index
      %42 = vector.load %arg7[%c0_22, %c0_23] : memref<8x128xf32, #tpu.memory_space<vmem>>, vector<8x128xf32>
      %c0_24 = arith.constant 0 : index
      %c0_25 = arith.constant 0 : index
      %43 = vector.load %arg6[%c0_24, %c0_25] : memref<8x128xf32, #tpu.memory_space<vmem>>, vector<8x128xf32>
      tpu.vector_store %arg6[%c0_24, %c0_25], %42 {strides = array<i32>} : memref<8x128xf32, #tpu.memory_space<vmem>>, vector<8x128xf32>,
    } else {
    }
    return
  }
  func.func @transform_0(%arg0: i32) -> (i32, i32) {
    %c0_i32 = arith.constant 0 : i32
    %c0_i32_0 = arith.constant 0 : i32
    %c0_i32_1 = arith.constant 0 : i32
    return %c0_i32, %c0_i32_0 : i32, i32
  }
  func.func @transform_1(%arg0: i32) -> (i32, i32) {
    %c0_i32 = arith.constant 0 : i32
    %c0_i32_0 = arith.constant 0 : i32
    return %c0_i32, %arg0 : i32, i32
  }
  func.func @transform_2(%arg0: i32) -> (i32, i32) {
    %c0_i32 = arith.constant 0 : i32
    %c0_i32_0 = arith.constant 0 : i32
    return %c0_i32, %arg0 : i32, i32
  }
  func.func @transform_3(%arg0: i32) -> (i32, i32) {
    %c0_i32 = arith.constant 0 : i32
    %c0_i32_0 = arith.constant 0 : i32
    return %arg0, %c0_i32 : i32, i32
  }
  func.func @transform_4(%arg0: i32) -> (i32, i32) {
    %c0_i32 = arith.constant 0 : i32
    %c0_i32_0 = arith.constant 0 : i32
    %c0_i32_1 = arith.constant 0 : i32
    return %c0_i32, %c0_i32_0 : i32, i32
  }
  func.func @transform_5(%arg0: i32) -> (i32, i32) {
    %c0_i32 = arith.constant 0 : i32
    %c0_i32_0 = arith.constant 0 : i32
    %c0_i32_1 = arith.constant 0 : i32
    return %c0_i32, %c0_i32_0 : i32, i32
  }
}

</mosaic_0001>

<llo_original>
// kernel: tpu_custom_call.1
$region0: #{tpu_custom_call.1}
  #allocation0 [shape = 'u32[]', space=smem, size = 0x4, offset = 0x4, fixed_abs, tag = 'smem constant byte address 0x4 - core index']
  #allocation1 [shape = 'u32[144,128]{1,0:T(1,128)}', space=vmem, size = 0x12000, scoped, tag = 'internal scratch']
  #allocation2 [shape = 'f32[8,128]{1,0:T(8,128)}', space=vmem, size = 0x1000, scoped, tag = 'scratch operand']
  %s0 = inlined_call_operand.hbm [shape: bf16[8,128], index: 0, kind: input, shape index: {}]
  %s1 = inlined_call_operand.hbm [shape: bf16[128,256], index: 1, kind: input, shape index: {}]
  %s2 = inlined_call_operand.hbm [shape: f32[2,256], index: 2, kind: input, shape index: {}]
  %s3 = inlined_call_operand.hbm [shape: bf16[256,128], index: 3, kind: input, shape index: {}]
  %s4 = inlined_call_operand.vmem [shape: f32[1,128], index: 4, kind: input, shape index: {}]
  %s5 = inlined_call_operand.hbm [shape: f32[8,128], index: 5, kind: output, shape index: {}]
  %s6 = sld [smem:[#allocation0]]
  $region77: #{tpu_custom_call.1} parent=0
    _
  %s8 = ssub.s32 1, %s6
  %s9 = scalar_select 0, %s8, %s6
  $region1: #{tpu_custom_call.1} parent=0
    #allocation3 [shape = 'u8[2048]{0}', space=vmem, size = 0x800, scoped, tag = 'input window, operand 0, single buffered']
    #allocation4 [shape = 's32[2]{0}', space=sflag, size = 0x8, scoped, tag = 'scoped memory for tpu_custom_call.1']
    #allocation5 [shape = 's32[2]{0}', space=sflag, size = 0x8, scoped, tag = 'scoped memory for tpu_custom_call.1']
    #allocation6 [shape = 'u8[65536]{0}', space=vmem, size = 0x10000, scoped, tag = 'input window, operand 1']
    #allocation7 [shape = 's32[2]{0}', space=sflag, size = 0x8, scoped, tag = 'scoped memory for tpu_custom_call.1']
    #allocation8 [shape = 'u8[2048]{0}', space=vmem, size = 0x800, scoped, tag = 'input window, operand 2']
    #allocation9 [shape = 'u8[65536]{0}', space=vmem, size = 0x10000, scoped, tag = 'input window, operand 3']
    #allocation10 [shape = 's32[2]{0}', space=sflag, size = 0x8, scoped, tag = 'scoped memory for tpu_custom_call.1']
    #allocation11 [shape = 'u8[4096]{0}', space=vmem, size = 0x1000, scoped, tag = 'output window, operand 0, single buffered']
    %10 = vsyncpa [#allocation4], 0
    %11 = vsyncpa [#allocation7], 0
    %s12 = scalar_lea.sflag [#allocation7], 1
    %13 = vsyncpa %s12, 0
    %14 = vsyncpa [#allocation10], 0
    %s15 = scalar_lea.sflag [#allocation10], 1
    %16 = vsyncpa %s15, 0
    %17 = vsyncpa [#allocation5], 0
    loop: start=0, step=1, limit=4
    $region2: #{tpu_custom_call.1} parent=1 // loop_pre_header
      _
    $region3: #{tpu_custom_call.1} parent=1 // loop_header
      %s19 = sphi 0, %s23
      %p20 = scmp.ge.s32.totalorder %s19, 4
      %s27 = sphi 0, %s27
      %s29 = sphi 0, %s27
      %s30 = sphi 0, %s29
      %s44 = sphi 0, %s30
      %s50 = sphi 0, %s52
      %s53 = sphi 0, %s50
      %s54 = sphi 0, %s53
      %s70 = sphi 0, %s54
      %s76 = sphi 0, %s78
      %s79 = sphi 0, %s76
      %s80 = sphi 0, %s79
      %s96 = sphi 0, %s80
      %s102 = sphi 0, %s104
      %s105 = sphi 0, %s102
      %s106 = sphi 0, %s105
      %s122 = sphi 0, %s106
      %s126 = sphi 0, %s126
      %s128 = sphi 0, %s126
      %s129 = sphi 0, %s128
      %s143 = sphi 0, %s129
      %s147 = sphi 0, %s147
      %s149 = sphi 0, %s147
      %s150 = sphi 0, %s149
      %s164 = sphi 0, %s150
    $region4: #{tpu_custom_call.1} parent=1 // loop_header_branch
      %22 = sbr.rel (%p20) target = $region8
    $region5: #{tpu_custom_call.1} parent=1 // loop_body
      %s24 = ssub.s32 %s19, 1
      %s25 = ssub.s32 %s19, 2
      %s26 = sadd.s32 %s19, 1
      %s28 = sadd.s32 %s27, 1
      %p31 = scmp.eq.s32.totalorder %s19, 1
      %p32 = scmp.ne.s32.totalorder %s27, %s29
      %p33 = scmp.eq.s32.totalorder %s19, 0
      %p34 = por %p32, %p33
      %p35 = scmp.ne.s32.totalorder %s27, %s29
      %p36 = scmp.eq.s32.totalorder %s24, 1
      %p37 = por %p35, %p36
      %p38 = scmp.ne.s32.totalorder %s29, %s30
      %p39 = scmp.eq.s32.totalorder %s24, 0
      %p40 = por %p38, %p39
      %p41 = scmp.ne.s32.totalorder %s29, %s30
      %p42 = scmp.eq.s32.totalorder %s25, 1
      %p43 = por %p41, %p42
      %p45 = scmp.ne.s32.totalorder %s30, %s44
      %p46 = scmp.eq.s32.totalorder %s25, 0
      %p47 = por %p45, %p46
      %s48 = ssub.s32 %s19, %s26
      %p49 = scmp.eq.s32.totalorder %s48, 0
      %s51 = sadd.s32 %s50, 1
      %s52 = scalar_select %p49, %s50, %s51
      %p55 = pneg %p49
      %p56 = scmp.eq.s32.totalorder %s19, 1
      %p57 = por %p55, %p56
      %p58 = scmp.ne.s32.totalorder %s50, %s53
      %p59 = scmp.eq.s32.totalorder %s19, 0
      %p60 = por %p58, %p59
      %p61 = scmp.ne.s32.totalorder %s50, %s53
      %p62 = scmp.eq.s32.totalorder %s24, 1
      %p63 = por %p61, %p62
      %p64 = scmp.ne.s32.totalorder %s53, %s54
      %p65 = scmp.eq.s32.totalorder %s24, 0
      %p66 = por %p64, %p65
      %p67 = scmp.ne.s32.totalorder %s53, %s54
      %p68 = scmp.eq.s32.totalorder %s25, 1
      %p69 = por %p67, %p68
      %p71 = scmp.ne.s32.totalorder %s54, %s70
      %p72 = scmp.eq.s32.totalorder %s25, 0
      %p73 = por %p71, %p72
      %s74 = ssub.s32 %s19, %s26
      %p75 = scmp.eq.s32.totalorder %s74, 0
      %s77 = sadd.s32 %s76, 1
      %s78 = scalar_select %p75, %s76, %s77
      %p81 = pneg %p75
      %p82 = scmp.eq.s32.totalorder %s19, 1
      %p83 = por %p81, %p82
      %p84 = scmp.ne.s32.totalorder %s76, %s79
      %p85 = scmp.eq.s32.totalorder %s19, 0
      %p86 = por %p84, %p85
      %p87 = scmp.ne.s32.totalorder %s76, %s79
      %p88 = scmp.eq.s32.totalorder %s24, 1
      %p89 = por %p87, %p88
      %p90 = scmp.ne.s32.totalorder %s79, %s80
      %p91 = scmp.eq.s32.totalorder %s24, 0
      %p92 = por %p90, %p91
      %p93 = scmp.ne.s32.totalorder %s79, %s80
      %p94 = scmp.eq.s32.totalorder %s25, 1
      %p95 = por %p93, %p94
      %p97 = scmp.ne.s32.totalorder %s80, %s96
      %p98 = scmp.eq.s32.totalorder %s25, 0
      %p99 = por %p97, %p98
      %s100 = ssub.s32 %s19, %s26
      %p101 = scmp.eq.s32.totalorder %s100, 0
      %s103 = sadd.s32 %s102, 1
      %s104 = scalar_select %p101, %s102, %s103
      %p107 = pneg %p101
      %p108 = scmp.eq.s32.totalorder %s19, 1
      %p109 = por %p107, %p108
      %p110 = scmp.ne.s32.totalorder %s102, %s105
      %p111 = scmp.eq.s32.totalorder %s19, 0
      %p112 = por %p110, %p111
      %p113 = scmp.ne.s32.totalorder %s102, %s105
      %p114 = scmp.eq.s32.totalorder %s24, 1
      %p115 = por %p113, %p114
      %p116 = scmp.ne.s32.totalorder %s105, %s106
      %p117 = scmp.eq.s32.totalorder %s24, 0
      %p118 = por %p116, %p117
      %p119 = scmp.ne.s32.totalorder %s105, %s106
      %p120 = scmp.eq.s32.totalorder %s25, 1
      %p121 = por %p119, %p120
      %p123 = scmp.ne.s32.totalorder %s106, %s122
      %p124 = scmp.eq.s32.totalorder %s25, 0
      %p125 = por %p123, %p124
      %s127 = sadd.s32 %s126, 1
      %p130 = scmp.eq.s32.totalorder %s19, 1
      %p131 = scmp.ne.s32.totalorder %s126, %s128
      %p132 = scmp.eq.s32.totalorder %s19, 0
      %p133 = por %p131, %p132
      %p134 = scmp.ne.s32.totalorder %s126, %s128
      %p135 = scmp.eq.s32.totalorder %s24, 1
      %p136 = por %p134, %p135
      %p137 = scmp.ne.s32.totalorder %s128, %s129
      %p138 = scmp.eq.s32.totalorder %s24, 0
      %p139 = por %p137, %p138
      %p140 = scmp.ne.s32.totalorder %s128, %s129
      %p141 = scmp.eq.s32.totalorder %s25, 1
      %p142 = por %p140, %p141
      %p144 = scmp.ne.s32.totalorder %s129, %s143
      %p145 = scmp.eq.s32.totalorder %s25, 0
      %p146 = por %p144, %p145
      %s148 = sadd.s32 %s147, 1
      %p151 = scmp.eq.s32.totalorder %s19, 1
      %p152 = scmp.ne.s32.totalorder %s147, %s149
      %p153 = scmp.eq.s32.totalorder %s19, 0
      %p154 = por %p152, %p153
      %p155 = scmp.ne.s32.totalorder %s147, %s149
      %p156 = scmp.eq.s32.totalorder %s24, 1
      %p157 = por %p155, %p156
      %p158 = scmp.ne.s32.totalorder %s149, %s150
      %p159 = scmp.eq.s32.totalorder %s24, 0
      %p160 = por %p158, %p159
      %p161 = scmp.ne.s32.totalorder %s149, %s150
      %p162 = scmp.eq.s32.totalorder %s25, 1
      %p163 = por %p161, %p162
      %p165 = scmp.ne.s32.totalorder %s150, %s164
      %p166 = scmp.eq.s32.totalorder %s25, 0
      %p167 = por %p165, %p166
      %p168 = scmp.le.s32.totalorder 1, %s19
      %p169 = scmp.lt.s32.totalorder %s19, 3
      %p170 = pnand %p168, %p169
      %p171 = pneg %p170
      // Predicated region
      $region9: #{tpu_custom_call.1} parent=5 // pred_check
        _
      $region10: #{tpu_custom_call.1} parent=5 // pred_check_branch
        %173 = sbr.rel (%p170) target = $region12
      $region11: #{tpu_custom_call.1} parent=5 // pred_region
        %s174 = ssub.s32 %s19, 1
        // Predicated region
        $region13: #{tpu_custom_call.1} parent=11 // pred_check
          %p175 = pneg %p40
        $region14: #{tpu_custom_call.1} parent=11 // pred_check_branch
          %177 = sbr.rel (%p175) target = $region16
        $region15: #{tpu_custom_call.1} parent=11 // pred_region
          %s179 = ssub.s32 64, 64
          %180 = vsyncadd [#allocation4], %s179
          %s182 = sshll.u32 [#allocation3], 4
          %s183 = int_to_ptr.vmem [resolvable:$true] %s182
          %185 = dma.hbm_to_vmem [thread:$0]  %s0, 64, %s183, [#allocation4]
        $region16: #{tpu_custom_call.1} parent=11 // pred_fallthru
          _
        // Predicated region
        $region17: #{tpu_custom_call.1} parent=11 // pred_check
          %p186 = pneg %p139
        $region18: #{tpu_custom_call.1} parent=11 // pred_check_branch
          %188 = sbr.rel (%p186) target = $region20
        $region19: #{tpu_custom_call.1} parent=11 // pred_region
          _
        $region20: #{tpu_custom_call.1} parent=11 // pred_fallthru
          _
      $region12: #{tpu_custom_call.1} parent=5 // pred_fallthru
        _
      %p189 = scmp.lt.s32.totalorder %s19, 2
      // Predicated region
      $region21: #{tpu_custom_call.1} parent=5 // pred_check
        %p190 = pneg %p189
      $region22: #{tpu_custom_call.1} parent=5 // pred_check_branch
        %192 = sbr.rel (%p190) target = $region24
      $region23: #{tpu_custom_call.1} parent=5 // pred_region
        // Predicated region
        $region25: #{tpu_custom_call.1} parent=23 // pred_check
          %p193 = pneg %p60
        $region26: #{tpu_custom_call.1} parent=23 // pred_check_branch
          %195 = sbr.rel (%p193) target = $region28
        $region27: #{tpu_custom_call.1} parent=23 // pred_region
          %s196 = sand.u32 %s19, 1
          %s197 = scalar_lea.sflag [#allocation7], %s196
          %s198 = sand.u32 %s50, 1
          %s199 = smul.addr %s198, 64
          %s200 = scalar_lea.vmem [#allocation6], %s199
          %s202 = ssub.s32 1024, 1024
          %203 = vsyncadd %s197, %s202
          %s204 = smul.addr %s19, 64
          %s205 = scalar_lea.hbm %s1, %s204
          %s206 = sshll.u32 %s200, 4
          %s207 = int_to_ptr.vmem [resolvable:$true] %s206
          %212 = dma.hbm_to_vmem [thread:$0]  %s205, 1024, %s207, %s197, 128, 64, 4
        $region28: #{tpu_custom_call.1} parent=23 // pred_fallthru
          _
        // Predicated region
        $region29: #{tpu_custom_call.1} parent=23 // pred_check
          %p213 = pneg %p86
        $region30: #{tpu_custom_call.1} parent=23 // pred_check_branch
          %215 = sbr.rel (%p213) target = $region32
        $region31: #{tpu_custom_call.1} parent=23 // pred_region
          %s216 = sand.u32 %s19, 1
          %s217 = scalar_lea.sflag [#allocation7], %s216
          %s218 = sand.u32 %s76, 1
          %s219 = smul.addr %s218, 2
          %s220 = scalar_lea.vmem [#allocation8], %s219
          %s222 = ssub.s32 32, 32
          %223 = vsyncadd %s217, %s222
          %s224 = smul.addr %s19, 32
          %s225 = scalar_lea.hbm %s2, %s224
          %s227 = sshll.u32 %s220, 4
          %s228 = int_to_ptr.vmem [resolvable:$true] %s227
          %230 = dma.hbm_to_vmem [thread:$0]  %s225, 32, %s228, %s217
        $region32: #{tpu_custom_call.1} parent=23 // pred_fallthru
          _
        // Predicated region
        $region33: #{tpu_custom_call.1} parent=23 // pred_check
          %p231 = pneg %p112
        $region34: #{tpu_custom_call.1} parent=23 // pred_check_branch
          %233 = sbr.rel (%p231) target = $region36
        $region35: #{tpu_custom_call.1} parent=23 // pred_region
          %s234 = sand.u32 %s102, 1
          %s235 = scalar_lea.sflag [#allocation10], %s234
          %s236 = sand.u32 %s102, 1
          %s237 = smul.addr %s236, 64
          %s238 = scalar_lea.vmem [#allocation9], %s237
          %s239 = smul.u32 16, %s19
          %s241 = ssub.s32 1024, 1024
          %242 = vsyncadd %s235, %s241
          %s243 = smul.addr %s239, 64
          %s244 = scalar_lea.hbm %s3, %s243
          %s245 = sshll.u32 %s238, 4
          %s246 = int_to_ptr.vmem [resolvable:$true] %s245
          %251 = dma.hbm_to_vmem [thread:$0]  %s244, 1024, %s246, %s235, 64, 64, 4
        $region36: #{tpu_custom_call.1} parent=23 // pred_fallthru
          _
      $region24: #{tpu_custom_call.1} parent=5 // pred_fallthru
        _
      %p252 = scmp.le.s32.totalorder 1, %s19
      %p253 = scmp.lt.s32.totalorder %s19, 3
      %p254 = pnand %p252, %p253
      %p255 = pneg %p254
      // Predicated region
      $region37: #{tpu_custom_call.1} parent=5 // pred_check
        _
      $region38: #{tpu_custom_call.1} parent=5 // pred_check_branch
        %257 = sbr.rel (%p254) target = $region40
      $region39: #{tpu_custom_call.1} parent=5 // pred_region
        %s258 = ssub.s32 %s19, 1
        // Predicated region
        $region41: #{tpu_custom_call.1} parent=39 // pred_check
          %p259 = pneg %p40
        $region42: #{tpu_custom_call.1} parent=39 // pred_check_branch
          %261 = sbr.rel (%p259) target = $region44
        $region43: #{tpu_custom_call.1} parent=39 // pred_region
          %262 = dma.done [#allocation4], 64
        $region44: #{tpu_custom_call.1} parent=39 // pred_fallthru
          _
        %s263 = sand.u32 %s24, 1
        %s264 = scalar_lea.sflag [#allocation7], %s263
        %s265 = sand.u32 %s53, 1
        %s266 = smul.addr %s265, 64
        %s267 = scalar_lea.vmem [#allocation6], %s266
        // Predicated region
        $region45: #{tpu_custom_call.1} parent=39 // pred_check
          %p268 = pneg %p66
        $region46: #{tpu_custom_call.1} parent=39 // pred_check_branch
          %270 = sbr.rel (%p268) target = $region48
        $region47: #{tpu_custom_call.1} parent=39 // pred_region
          %271 = dma.done %s264, 1024
        $region48: #{tpu_custom_call.1} parent=39 // pred_fallthru
          _
        %s272 = sand.u32 %s24, 1
        %s273 = scalar_lea.sflag [#allocation7], %s272
        %s274 = sand.u32 %s79, 1
        %s275 = smul.addr %s274, 2
        %s276 = scalar_lea.vmem [#allocation8], %s275
        // Predicated region
        $region49: #{tpu_custom_call.1} parent=39 // pred_check
          %p277 = pneg %p92
        $region50: #{tpu_custom_call.1} parent=39 // pred_check_branch
          %279 = sbr.rel (%p277) target = $region52
        $region51: #{tpu_custom_call.1} parent=39 // pred_region
          %280 = dma.done %s273, 32
        $region52: #{tpu_custom_call.1} parent=39 // pred_fallthru
          _
        %s281 = sand.u32 %s105, 1
        %s282 = scalar_lea.sflag [#allocation10], %s281
        %s283 = sand.u32 %s105, 1
        %s284 = smul.addr %s283, 64
        %s285 = scalar_lea.vmem [#allocation9], %s284
        // Predicated region
        $region53: #{tpu_custom_call.1} parent=39 // pred_check
          %p286 = pneg %p118
        $region54: #{tpu_custom_call.1} parent=39 // pred_check_branch
          %288 = sbr.rel (%p286) target = $region56
        $region55: #{tpu_custom_call.1} parent=39 // pred_region
          %289 = dma.done %s282, 1024
        $region56: #{tpu_custom_call.1} parent=39 // pred_fallthru
          _
        %p290 = pneg %p40
        %p291 = pneg %p37
        %s292 = sand.u32 %s24, 1
        %s293 = scalar_lea.sflag [#allocation7], %s292
        %s294 = sand.u32 %s53, 1
        %s295 = smul.addr %s294, 64
        %s296 = scalar_lea.vmem [#allocation6], %s295
        %p297 = pneg %p66
        %p298 = pneg %p63
        %s299 = sand.u32 %s24, 1
        %s300 = scalar_lea.sflag [#allocation7], %s299
        %s301 = sand.u32 %s79, 1
        %s302 = smul.addr %s301, 2
        %s303 = scalar_lea.vmem [#allocation8], %s302
        %p304 = pneg %p92
        %p305 = pneg %p89
        %s306 = sand.u32 %s105, 1
        %s307 = scalar_lea.sflag [#allocation10], %s306
        %s308 = sand.u32 %s105, 1
        %s309 = smul.addr %s308, 64
        %s310 = scalar_lea.vmem [#allocation9], %s309
        %p311 = pneg %p118
        %p312 = pneg %p115
        %p313 = pneg %p139
        %p314 = pneg %p136
        %p315 = pneg %p160
        %p316 = pneg %p157
        %s317 = smul.u32 16, %s24
        %p319 = scmp.eq.s32.totalorder %s24, 0
        // Predicated region
        $region57: #{tpu_custom_call.1} parent=39 // pred_check
          %p320 = pneg %p319
        $region58: #{tpu_custom_call.1} parent=39 // pred_check_branch
          %322 = sbr.rel (%p320) target = $region60
        $region59: #{tpu_custom_call.1} parent=39 // pred_region
          %v323 = vld [vmem:[%s4] sm:$0x1]
          %v325 = vlaneseq
          %v326 = vshrl.u32 %v325, 7
          %v327 = vsub.s32 0, %v326
          %v328 = vrot.slane %v323, %v327
          %330 = vst [vmem:[#allocation2] sm:$0xff] %v328
        $region60: #{tpu_custom_call.1} parent=39 // pred_fallthru
          _
        %v331 = vld [vmem:[#allocation3] sm:$0xf]
        %v332 = vld [vmem:[%s267] sm:$0xf]
        %v333 = vld [vmem:[%s267 + $0x4] sm:$0xf]
        %v334 = vld [vmem:[%s267 + $0x8] sm:$0xf]
        %v335 = vld [vmem:[%s267 + $0xc] sm:$0xf]
        %v336 = vld [vmem:[%s267 + $0x10] sm:$0xf]
        %v337 = vld [vmem:[%s267 + $0x14] sm:$0xf]
        %v338 = vld [vmem:[%s267 + $0x18] sm:$0xf]
        %v339 = vld [vmem:[%s267 + $0x1c] sm:$0xf]
        %v340 = vld [vmem:[%s267 + $0x20] sm:$0xf]
        %v341 = vld [vmem:[%s267 + $0x24] sm:$0xf]
        %v342 = vld [vmem:[%s267 + $0x28] sm:$0xf]
        %v343 = vld [vmem:[%s267 + $0x2c] sm:$0xf]
        %v344 = vld [vmem:[%s267 + $0x30] sm:$0xf]
        %v345 = vld [vmem:[%s267 + $0x34] sm:$0xf]
        %v346 = vld [vmem:[%s267 + $0x38] sm:$0xf]
        %v347 = vld [vmem:[%s267 + $0x3c] sm:$0xf]
        %v364 = vunpack.c.l.b16 %v332
        %v365 = vunpack.c.l.b16 %v333
        %v366 = vunpack.c.l.b16 %v334
        %v367 = vunpack.c.l.b16 %v335
        %v368 = vunpack.c.l.b16 %v336
        %v369 = vunpack.c.l.b16 %v337
        %v370 = vunpack.c.l.b16 %v338
        %v371 = vunpack.c.l.b16 %v339
        %v372 = vunpack.c.l.b16 %v340
        %v373 = vunpack.c.l.b16 %v341
        %v374 = vunpack.c.l.b16 %v342
        %v375 = vunpack.c.l.b16 %v343
        %v376 = vunpack.c.l.b16 %v344
        %v377 = vunpack.c.l.b16 %v345
        %v378 = vunpack.c.l.b16 %v346
        %v379 = vunpack.c.l.b16 %v347
        %v380 = vpack.c.b16 %v365, %v364
        %v381 = vpack.c.b16 %v367, %v366
        %v382 = vpack.c.b16 %v369, %v368
        %v383 = vpack.c.b16 %v371, %v370
        %v384 = vpack.c.b16 %v373, %v372
        %v385 = vpack.c.b16 %v375, %v374
        %v386 = vpack.c.b16 %v377, %v376
        %v387 = vpack.c.b16 %v379, %v378
        %396 = vmatprep.subr.bf16.mxu0 0
        %397 = vmatpush1.bf16.msra.mxu0 %v387
        %398 = vmatprep.subr.bf16.mxu0 0
        %399 = vmatpush1.bf16.msra.mxu0 %v386
        %400 = vmatprep.subr.bf16.mxu0 0
        %401 = vmatpush1.bf16.msra.mxu0 %v385
        %402 = vmatprep.subr.bf16.mxu0 0
        %403 = vmatpush1.bf16.msra.mxu0 %v384
        %404 = vmatprep.subr.bf16.mxu0 0
        %405 = vmatpush1.bf16.msra.mxu0 %v383
        %406 = vmatprep.subr.bf16.mxu0 0
        %407 = vmatpush1.bf16.msra.mxu0 %v382
        %408 = vmatprep.subr.bf16.mxu0 0
        %409 = vmatpush1.bf16.msra.mxu0 %v381
        %410 = vmatprep.subr.bf16.mxu0 0
        %411 = vmatpush1.bf16.msra.mxu0 %v380
        %412 = vmatprep.subr.bf16.mxu0 0
        %413 = vmatpush2.bf16.msra.mxu0 0
        %414 = vmatprep.subr.bf16.mxu0 0
        %415 = vmatpush2.bf16.msra.mxu0 0
        %416 = vmatprep.subr.bf16.mxu0 0
        %417 = vmatpush2.bf16.msra.mxu0 0
        %418 = vmatprep.subr.bf16.mxu0 0
        %419 = vmatpush2.bf16.msra.mxu0 0
        %420 = vmatprep.subr.bf16.mxu0 0
        %421 = vmatpush2.bf16.msra.mxu0 0
        %422 = vmatprep.subr.bf16.mxu0 0
        %423 = vmatpush2.bf16.msra.mxu0 0
        %424 = vmatprep.subr.bf16.mxu0 0
        %425 = vmatpush2.bf16.msra.mxu0 0
        %426 = vmatprep.subr.bf16.mxu0 0
        %427 = vmatpush2.bf16.msra.mxu0 0
        %428 = vmatprep.mubr.bf16.mxu0 0
        %429 = vmatmul.mubr.bf16.gmra.mxu0 %v331
        %v430 = vpop.f32.mrf.mxu0
        %v431 = vadd.f32 0.0, %v430
        %v432 = vpop.f32.mrf.mxu0
        %v433 = vpop.f32.mrf.mxu0
        %v434 = vpop.f32.mrf.mxu0
        %435 = vdwg.mxu0
        %v436 = vrot.slane %v431, 4
        %v437 = vadd.f32 %v431, %v436
        %v438 = vrot.slane %v437, 2
        %v439 = vadd.f32 %v437, %v438
        %v440 = vrot.slane %v439, 1
        %v441 = vadd.f32 %v439, %v440
        %v442 = vrcp.pop 8.0
        %v443 = vmul.f32 %v441, %v442
        %v444 = vmul.f32 %v431, %v431
        %v445 = vrot.slane %v444, 4
        %v446 = vadd.f32 %v444, %v445
        %v447 = vrot.slane %v446, 2
        %v448 = vadd.f32 %v446, %v447
        %v449 = vrot.slane %v448, 1
        %v450 = vadd.f32 %v448, %v449
        %v451 = vmul.f32 %v450, %v442
        %v452 = vmul.f32 %v443, %v443
        %v453 = vsub.f32 %v451, %v452
        %v454 = vmax.f32 %v453, 0.0
        %v455 = vld [vmem:[%s276] sm:$0x1]
        %v456 = vld [vmem:[%s276 + $0x1] sm:$0x1]
        %v457 = vadd.f32 %v454, 1e-05
        %v458 = vrsqrt.pop %v457
        %v459 = vmul.f32 %v458, %v455
        %v460 = vmul.f32 %v443, %v459
        %v461 = vsub.f32 %v456, %v460
        %v462 = vlaneseq
        %v463 = vshrl.u32 %v462, 7
        %v464 = vsub.s32 0, %v463
        %v465 = vrot.slane %v459, %v464
        %v466 = vmul.f32 %v431, %v465
        %v467 = vlaneseq
        %v468 = vshrl.u32 %v467, 7
        %v469 = vsub.s32 0, %v468
        %v470 = vrot.slane %v461, %v469
        %v471 = vadd.f32 %v466, %v470
        %v472 = vmax.f32 %v471, 0.0
        %v473 = vld [vmem:[#allocation2] sm:$0xff]
        %v474 = vpack.c.bf16 %v472, %v472
        %v475 = vld [vmem:[%s285] sm:$0xf]
        %v476 = vld [vmem:[%s285 + $0x4] sm:$0xf]
        %v477 = vld [vmem:[%s285 + $0x8] sm:$0xf]
        %v478 = vld [vmem:[%s285 + $0xc] sm:$0xf]
        %v479 = vld [vmem:[%s285 + $0x10] sm:$0xf]
        %v480 = vld [vmem:[%s285 + $0x14] sm:$0xf]
        %v481 = vld [vmem:[%s285 + $0x18] sm:$0xf]
        %v482 = vld [vmem:[%s285 + $0x1c] sm:$0xf]
        %v483 = vld [vmem:[%s285 + $0x20] sm:$0xf]
        %v484 = vld [vmem:[%s285 + $0x24] sm:$0xf]
        %v485 = vld [vmem:[%s285 + $0x28] sm:$0xf]
        %v486 = vld [vmem:[%s285 + $0x2c] sm:$0xf]
        %v487 = vld [vmem:[%s285 + $0x30] sm:$0xf]
        %v488 = vld [vmem:[%s285 + $0x34] sm:$0xf]
        %v489 = vld [vmem:[%s285 + $0x38] sm:$0xf]
        %v490 = vld [vmem:[%s285 + $0x3c] sm:$0xf]
        %v507 = vunpack.c.l.b16 %v475
        %v508 = vunpack.c.l.b16 %v476
        %v509 = vunpack.c.l.b16 %v477
        %v510 = vunpack.c.l.b16 %v478
        %v511 = vunpack.c.l.b16 %v479
        %v512 = vunpack.c.l.b16 %v480
        %v513 = vunpack.c.l.b16 %v481
        %v514 = vunpack.c.l.b16 %v482
        %v515 = vunpack.c.l.b16 %v483
        %v516 = vunpack.c.l.b16 %v484
        %v517 = vunpack.c.l.b16 %v485
        %v518 = vunpack.c.l.b16 %v486
        %v519 = vunpack.c.l.b16 %v487
        %v520 = vunpack.c.l.b16 %v488
        %v521 = vunpack.c.l.b16 %v489
        %v522 = vunpack.c.l.b16 %v490
        %v523 = vpack.c.b16 %v508, %v507
        %v524 = vpack.c.b16 %v510, %v509
        %v525 = vpack.c.b16 %v512, %v511
        %v526 = vpack.c.b16 %v514, %v513
        %v527 = vpack.c.b16 %v516, %v515
        %v528 = vpack.c.b16 %v518, %v517
        %v529 = vpack.c.b16 %v520, %v519
        %v530 = vpack.c.b16 %v522, %v521
        %539 = vmatprep.subr.bf16.mxu0 0
        %540 = vmatpush1.bf16.msra.mxu0 %v530
        %541 = vmatprep.subr.bf16.mxu0 0
        %542 = vmatpush1.bf16.msra.mxu0 %v529
        %543 = vmatprep.subr.bf16.mxu0 0
        %544 = vmatpush1.bf16.msra.mxu0 %v528
        %545 = vmatprep.subr.bf16.mxu0 0
        %546 = vmatpush1.bf16.msra.mxu0 %v527
        %547 = vmatprep.subr.bf16.mxu0 0
        %548 = vmatpush1.bf16.msra.mxu0 %v526
        %549 = vmatprep.subr.bf16.mxu0 0
        %550 = vmatpush1.bf16.msra.mxu0 %v525
        %551 = vmatprep.subr.bf16.mxu0 0
        %552 = vmatpush1.bf16.msra.mxu0 %v524
        %553 = vmatprep.subr.bf16.mxu0 0
        %554 = vmatpush1.bf16.msra.mxu0 %v523
        %555 = vmatprep.subr.bf16.mxu0 0
        %556 = vmatpush2.bf16.msra.mxu0 0
        %557 = vmatprep.subr.bf16.mxu0 0
        %558 = vmatpush2.bf16.msra.mxu0 0
        %559 = vmatprep.subr.bf16.mxu0 0
        %560 = vmatpush2.bf16.msra.mxu0 0
        %561 = vmatprep.subr.bf16.mxu0 0
        %562 = vmatpush2.bf16.msra.mxu0 0
        %563 = vmatprep.subr.bf16.mxu0 0
        %564 = vmatpush2.bf16.msra.mxu0 0
        %565 = vmatprep.subr.bf16.mxu0 0
        %566 = vmatpush2.bf16.msra.mxu0 0
        %567 = vmatprep.subr.bf16.mxu0 0
        %568 = vmatpush2.bf16.msra.mxu0 0
        %569 = vmatprep.subr.bf16.mxu0 0
        %570 = vmatpush2.bf16.msra.mxu0 0
        %571 = vmatprep.mubr.bf16.mxu0 0
        %572 = vmatmul.mubr.bf16.gmra.mxu0 %v474
        %v573 = vpop.f32.mrf.mxu0
        %v574 = vadd.f32 0.0, %v573
        %v575 = vpop.f32.mrf.mxu0
        %v576 = vpop.f32.mrf.mxu0
        %v577 = vpop.f32.mrf.mxu0
        %578 = vdwg.mxu0
        %v579 = vadd.f32 %v473, %v574
        %580 = vst [vmem:[#allocation2] sm:$0xff] %v579
        %p581 = scmp.eq.s32.totalorder %s24, 1
        // Predicated region
        $region61: #{tpu_custom_call.1} parent=39 // pred_check
          %p582 = pneg %p581
        $region62: #{tpu_custom_call.1} parent=39 // pred_check_branch
          %584 = sbr.rel (%p582) target = $region64
        $region63: #{tpu_custom_call.1} parent=39 // pred_region
          %v585 = vld [vmem:[#allocation2] sm:$0xff]
          %586 = vst [vmem:[#allocation11] sm:$0xff] %v585
        $region64: #{tpu_custom_call.1} parent=39 // pred_fallthru
          _
        // Predicated region
        $region65: #{tpu_custom_call.1} parent=39 // pred_check
          %p587 = pneg %p157
        $region66: #{tpu_custom_call.1} parent=39 // pred_check_branch
          %589 = sbr.rel (%p587) target = $region68
        $region67: #{tpu_custom_call.1} parent=39 // pred_region
          %s591 = ssub.s32 128, 128
          %592 = vsyncadd [#allocation5], %s591
          %s594 = sshll.u32 [#allocation11], 4
          %s595 = int_to_ptr.vmem [resolvable:$true] %s594
          %597 = dma.vmem_to_hbm [thread:$0]  %s595, 128, %s5, [#allocation5]
        $region68: #{tpu_custom_call.1} parent=39 // pred_fallthru
          _
        // Predicated region
        $region69: #{tpu_custom_call.1} parent=39 // pred_check
          %p598 = pneg %p157
        $region70: #{tpu_custom_call.1} parent=39 // pred_check_branch
          %600 = sbr.rel (%p598) target = $region72
        $region71: #{tpu_custom_call.1} parent=39 // pred_region
          %601 = dma.done [#allocation5], 128
        $region72: #{tpu_custom_call.1} parent=39 // pred_fallthru
          _
      $region40: #{tpu_custom_call.1} parent=5 // pred_fallthru
        _
      %p602 = scmp.le.s32.totalorder 2, %s19
      // Predicated region
      $region73: #{tpu_custom_call.1} parent=5 // pred_check
        %p603 = pneg %p602
      $region74: #{tpu_custom_call.1} parent=5 // pred_check_branch
        %605 = sbr.rel (%p603) target = $region76
      $region75: #{tpu_custom_call.1} parent=5 // pred_region
        %s606 = ssub.s32 %s19, 2
      $region76: #{tpu_custom_call.1} parent=5 // pred_fallthru
        _
    $region6: #{tpu_custom_call.1} parent=1 // loop_footer
      %s23 = sadd.s32 1, %s19
    $region7: #{tpu_custom_call.1} parent=1 // loop_footer_branch
      %18 = sbr.rel target = $region3
    $region8: #{tpu_custom_call.1} parent=1 // loop_exit
      _
    %607 = vsyncpa [#allocation4], 1
    %s608 = scalar_lea.sflag [#allocation4], 1
    %609 = vsyncpa %s608, 1
    %610 = vsyncpa [#allocation7], 1
    %s611 = scalar_lea.sflag [#allocation7], 1
    %612 = vsyncpa %s611, 1
    %613 = vsyncpa [#allocation10], 1
    %s614 = scalar_lea.sflag [#allocation10], 1
    %615 = vsyncpa %s614, 1
    %616 = vsyncpa [#allocation5], 1
    %s617 = scalar_lea.sflag [#allocation5], 1
    %618 = vsyncpa %s617, 1

</llo_original>
